<compile_context>
chip_gen: v7x
topology: tpu7x:2x2x1
jax: 0.10.0
libtpu: 0.0.40
codegen_flags: <defaults>
</compile_context>

<pallas_src>
import functools

import jax
import jax.numpy as jnp
from jax.experimental import pallas as pl
from jax.experimental.pallas import tpu as pltpu


def _mbstd_kernel(x_ref, o_ref, *, G, NF, c, HW, C_lanes):
    """One grid step = TM subgroups, lane-dense layout.

    x_ref : (G, TM, C*HW)          -- the G samples sharing statistics
    o_ref : (G, TM, C*HW + NF*HW)  -- pass-through lanes + std-feature lanes
    """
    x = x_ref[...]                                   # (G, TM, C*HW)
    TM = x.shape[1]

    # Pass-through of the original channels: one full-width store.  C*HW is a
    # multiple of 128 in the production epilogue (512*16) and in the tests, so
    # this is an unmasked vst.
    o_ref[:, :, :C_lanes] = x

    # --- minibatch stddev feature (f32 accumulation) ---
    xf = x.astype(jnp.float32)
    mu = jnp.mean(xf, axis=0, keepdims=True)         # mean over group dim G
    d = xf - mu
    var = jnp.mean(d * d, axis=0)                    # (TM, C*HW)
    std = jnp.sqrt(var + 1e-08)

    # Per-feature mean over (c, H, W): with the flattened lane layout this is
    # a mean over the contiguous lane range [f*c*HW, (f+1)*c*HW).  NF is tiny
    # (1 or 2): static loop of lane-contiguous reduces + lane-range stores; no
    # sublane-range slicing (which would force relayout copies when c % 8 != 0).
    for f in range(NF):
        feat = jnp.mean(std[:, f * c * HW:(f + 1) * c * HW],
                        axis=-1, keepdims=True)      # (TM, 1)
        lo = C_lanes + f * HW
        o_ref[:, :, lo:lo + HW] = jnp.broadcast_to(
            feat[None], (G, TM, HW)).astype(o_ref.dtype)


def _choose_tm(M, G, lanes_in, lanes_out, itemsize,
               vmem_budget=24 * 1024 * 1024):
    """Number of subgroups processed per grid step.

    Constraints / goals:
      * legality: TM must be a multiple of 8 OR equal to M (last-two-dims
        tiling rule) and must divide M (so every block is full);
      * double-buffered (input + output) blocks plus ~3 f32 temporaries must
        fit a v7x-safe VMEM budget (v7x: 64 MiB/TC vs 128 MiB on v5e/v6e);
      * prefer the largest TM that still leaves >= 2 grid steps so both v7x
        TensorCores get work (measured no-op on single-TC v5e/v6e).
    """
    per_m = G * (2 * (lanes_in + lanes_out) * itemsize   # double-buffered I/O
                 + 3 * lanes_in * 4)                      # f32 temporaries
    fit = max(1, vmem_budget // max(per_m, 1))
    cands = [t for t in ([M] + list(range(8, M, 8)))
             if M % t == 0 and t <= fit]
    if not cands:
        # Even one subgroup exceeds the budget: fall back to the smallest
        # legal block; vmem_limit_bytes still caps the compiler.
        return 8 if (M >= 8 and M % 8 == 0) else M
    multi = [t for t in cands if M // t >= 2]
    return max(multi) if multi else max(cands)


def minibatch_std(x, group_size, num_channels=1):
    """Pallas implementation of MinibatchStdLayer.forward (NCHW in / NCHW out)."""
    N, C, H, W = x.shape
    G = min(group_size, N) if group_size is not None else N
    NF = num_channels
    assert C % NF == 0 and N % G == 0
    c = C // NF
    M = N // G
    HW = H * W
    CHW = C * HW
    OUT_L = CHW + NF * HW

    # Zero-copy lane-dense view with the group axis outermost (matches the
    # PyTorch reshape x.reshape(G, -1, F, c, H, W): sample n == (g, m),
    # g = n // M, m = n % M).
    x3 = x.reshape(G, M, CHW)

    TM = _choose_tm(M, G, CHW, OUT_L, x.dtype.itemsize)
    grid = (M // TM,)

    # TODO(synk): for bf16 inputs the second-to-last block dim only meets the
    # (16,128) packed min-tile when TM is a multiple of 16 (still legal when
    # TM == M); tests/production use f32.
    kern = functools.partial(_mbstd_kernel, G=G, NF=NF, c=c, HW=HW,
                             C_lanes=CHW)

    out = pl.pallas_call(
        kern,
        out_shape=jax.ShapeDtypeStruct((G, M, OUT_L), x.dtype),
        grid=grid,
        in_specs=[pl.BlockSpec((G, TM, CHW), lambda m: (0, m, 0))],
        out_specs=pl.BlockSpec((G, TM, OUT_L), lambda m: (0, m, 0)),
        compiler_params=pltpu.CompilerParams(
            dimension_semantics=("parallel",),
            vmem_limit_bytes=48 * 1024 * 1024,   # v7x-safe (<64 MiB), > v5e default
        ),
    )(x3)

    # (G, M, (C+NF)*HW) -> (N, C+NF, H, W): zero-copy, n = g*M + m.
    return out.reshape(N, C + NF, H, W)


def minibatch_std_ref(x, group_size, num_channels=1):
    """Pure-JAX reference mirroring the PyTorch forward exactly."""
    N, C, H, W = x.shape
    G = min(group_size, N) if group_size is not None else N
    NF = num_channels
    c = C // NF
    y = x.reshape(G, -1, NF, c, H, W)
    y = y - y.mean(axis=0)
    y = jnp.mean(jnp.square(y), axis=0)
    y = jnp.sqrt(y + 1e-08)
    y = y.mean(axis=(2, 3, 4))
    y = y.reshape(-1, NF, 1, 1)
    y = jnp.tile(y, (G, 1, H, W))
    return jnp.concatenate([x, y], axis=1)


if __name__ == "__main__":
    key = jax.random.PRNGKey(0)

    # Config 1: N=4, C=4, H=W=16, group_size=2, num_channels=1 (default)
    x = jax.random.normal(key, (4, 4, 16, 16), dtype=jnp.float32)
    out = minibatch_std(x, group_size=2, num_channels=1)
    jax.block_until_ready(out)
    ref = minibatch_std_ref(x, group_size=2, num_channels=1)
    assert out.shape == (4, 5, 16, 16)
    assert jnp.allclose(out, ref, atol=1e-5, rtol=1e-5), "mismatch (F=1)"

    # Config 2: exercise num_channels > 1 (M=1, single grid step)
    x2 = jax.random.normal(jax.random.PRNGKey(1), (2, 4, 16, 16),
                           dtype=jnp.float32)
    out2 = minibatch_std(x2, group_size=2, num_channels=2)
    jax.block_until_ready(out2)
    ref2 = minibatch_std_ref(x2, group_size=2, num_channels=2)
    assert out2.shape == (2, 6, 16, 16)
    assert jnp.allclose(out2, ref2, atol=1e-5, rtol=1e-5), "mismatch (F=2)"

    # Config 3: production-epilogue-like shape (H=W=4, group_size=4) with
    # M=16 so TM=8 and grid=(2,) -> exercises multi-subgroup blocks and the
    # 2-step parallel grid (both v7x TensorCores).
    x3_ = jax.random.normal(jax.random.PRNGKey(2), (64, 16, 4, 4),
                            dtype=jnp.float32)
    out3 = minibatch_std(x3_, group_size=4, num_channels=1)
    jax.block_until_ready(out3)
    ref3 = minibatch_std_ref(x3_, group_size=4, num_channels=1)
    assert out3.shape == (64, 17, 4, 4)
    assert jnp.allclose(out3, ref3, atol=1e-5, rtol=1e-5), "mismatch (epilogue)"

    print("KERNEL_OK")
</pallas_src>

<mosaic_0001>
module attributes {stable_mosaic.version = 11 : i64} {
  func.func @_mbstd_kernel(%arg0: i32, %arg1: memref<2x2x1024xf32, #tpu.memory_space<vmem>>, %arg2: memref<2x2x1280xf32, #tpu.memory_space<vmem>>) attributes {dimension_semantics = [#tpu.dimension_semantics<parallel>], iteration_bounds = array<i64: 1>, scalar_prefetch = 0 : i64, scratch_operands = 0 : i64, tpu.core_type = #tpu.core_type<tc>, window_params = [{transform_indices = @transform_0, window_bounds = array<i64: 2, 2, 1024>}, {transform_indices = @transform_1, window_bounds = array<i64: 2, 2, 1280>}]} {
    %c0 = arith.constant 0 : index
    %c0_0 = arith.constant 0 : index
    %c0_1 = arith.constant 0 : index
    %0 = vector.load %arg1[%c0, %c0_0, %c0_1] : memref<2x2x1024xf32, #tpu.memory_space<vmem>>, vector<2x2x1024xf32>
    %c0_2 = arith.constant 0 : index
    %c0_3 = arith.constant 0 : index
    %c0_4 = arith.constant 0 : index
    %1 = vector.load %arg2[%c0_2, %c0_3, %c0_4] : memref<2x2x1280xf32, #tpu.memory_space<vmem>>, vector<2x2x1024xf32>
    tpu.vector_store %arg2[%c0_2, %c0_3, %c0_4], %0 {strides = array<i32>} : memref<2x2x1280xf32, #tpu.memory_space<vmem>>, vector<2x2x1024xf32>,
    %cst = arith.constant dense<0.000000e+00> : vector<2x1024xf32>
    %2 = vector.multi_reduction <add>, %0, %cst [0] : vector<2x2x1024xf32> to vector<2x1024xf32>
    %3 = vector.shape_cast %2 : vector<2x1024xf32> to vector<1x2x1024xf32>
    %cst_5 = arith.constant 2.000000e+00 : f32
    %4 = vector.broadcast %cst_5 : f32 to vector<1x2x1024xf32>
    %5 = arith.divf %3, %4 : vector<1x2x1024xf32>
    %6 = vector.broadcast %5 : vector<1x2x1024xf32> to vector<2x2x1024xf32>
    %7 = arith.subf %0, %6 : vector<2x2x1024xf32>
    %8 = arith.mulf %7, %7 : vector<2x2x1024xf32>
    %cst_6 = arith.constant dense<0.000000e+00> : vector<2x1024xf32>
    %9 = vector.multi_reduction <add>, %8, %cst_6 [0] : vector<2x2x1024xf32> to vector<2x1024xf32>
    %cst_7 = arith.constant 2.000000e+00 : f32
    %10 = vector.broadcast %cst_7 : f32 to vector<2x1024xf32>
    %11 = arith.divf %9, %10 : vector<2x1024xf32>
    %cst_8 = arith.constant 9.99999993E-9 : f32
    %12 = vector.broadcast %cst_8 : f32 to vector<2x1024xf32>
    %13 = arith.addf %11, %12 : vector<2x1024xf32>
    %14 = math.sqrt %13 : vector<2x1024xf32>
    %cst_9 = arith.constant dense<0.000000e+00> : vector<2xf32>
    %15 = vector.multi_reduction <add>, %14, %cst_9 [1] : vector<2x1024xf32> to vector<2xf32>
    %16 = vector.shape_cast %15 : vector<2xf32> to vector<2x1xf32>
    %cst_10 = arith.constant 1.024000e+03 : f32
    %17 = vector.broadcast %cst_10 : f32 to vector<2x1xf32>
    %18 = arith.divf %16, %17 : vector<2x1xf32>
    %19 = vector.shape_cast %18 : vector<2x1xf32> to vector<1x2x1xf32>
    %20 = vector.shape_cast %19 : vector<1x2x1xf32> to vector<1x2x1xf32>
    %21 = vector.broadcast %20 : vector<1x2x1xf32> to vector<2x2x256xf32>
    %c0_11 = arith.constant 0 : index
    %c0_12 = arith.constant 0 : index
    %c1024 = arith.constant 1024 : index
    %22 = vector.load %arg2[%c0_11, %c0_12, %c1024] : memref<2x2x1280xf32, #tpu.memory_space<vmem>>, vector<2x2x256xf32>
    tpu.vector_store %arg2[%c0_11, %c0_12, %c1024], %21 {strides = array<i32>} : memref<2x2x1280xf32, #tpu.memory_space<vmem>>, vector<2x2x256xf32>,
    return
  }
  func.func @transform_0(%arg0: i32) -> (i32, i32, i32) {
    %c0_i32 = arith.constant 0 : i32
    %c0_i32_0 = arith.constant 0 : i32
    %c0_i32_1 = arith.constant 0 : i32
    return %c0_i32, %arg0, %c0_i32_0 : i32, i32, i32
  }
  func.func @transform_1(%arg0: i32) -> (i32, i32, i32) {
    %c0_i32 = arith.constant 0 : i32
    %c0_i32_0 = arith.constant 0 : i32
    %c0_i32_1 = arith.constant 0 : i32
    return %c0_i32, %arg0, %c0_i32_0 : i32, i32, i32
  }
}

</mosaic_0001>

<llo_original>
// kernel: tpu_custom_call.1
$region0: #{tpu_custom_call.1}
  #allocation0 [shape = 'u32[]', space=smem, size = 0x4, offset = 0x4, fixed_abs, tag = 'smem constant byte address 0x4 - core index']
  #allocation1 [shape = 'u32[144,128]{1,0:T(1,128)}', space=vmem, size = 0x12000, scoped, tag = 'internal scratch']
  %s0 = inlined_call_operand.hbm [shape: f32[2,2,1024], index: 0, kind: input, shape index: {}]
  %s1 = inlined_call_operand.hbm [shape: f32[2,2,1280], index: 1, kind: output, shape index: {}]
  %s2 = sld [smem:[#allocation0]]
  $region18: #{tpu_custom_call.1} parent=0
    _
  %s4 = ssub.s32 1, %s2
  %s5 = scalar_select 0, %s4, %s2
  $region1: #{tpu_custom_call.1} parent=0
    #allocation2 [shape = 'u8[16384]{0}', space=vmem, size = 0x4000, scoped, tag = 'input window, operand 0, single buffered']
    #allocation3 [shape = 's32[1]{0}', space=sflag, size = 0x4, scoped, tag = 'scoped memory for tpu_custom_call.1']
    #allocation4 [shape = 's32[1]{0}', space=sflag, size = 0x4, scoped, tag = 'scoped memory for tpu_custom_call.1']
    #allocation5 [shape = 'u8[20480]{0}', space=vmem, size = 0x5000, scoped, tag = 'output window, operand 0, single buffered']
    %6 = vsyncpa [#allocation3], 0
    %7 = vsyncpa [#allocation4], 0
    // Predicated region
    $region2: #{tpu_custom_call.1} parent=1 // pred_check
      _
    $region3: #{tpu_custom_call.1} parent=1 // pred_check_branch
      %9 = sbr.rel (0) target = $region5
    $region4: #{tpu_custom_call.1} parent=1 // pred_region
      %s11 = ssub.s32 512, 512
      %12 = vsyncadd [#allocation3], %s11
      %s13 = sshll.u32 [#allocation2], 4
      %s14 = int_to_ptr.vmem [resolvable:$true] %s13
      %19 = dma.hbm_to_vmem [thread:$0]  %s0, 512, %s14, [#allocation3], 256, 256, 16
    $region5: #{tpu_custom_call.1} parent=1 // pred_fallthru
      _
    // Predicated region
    $region6: #{tpu_custom_call.1} parent=1 // pred_check
      _
    $region7: #{tpu_custom_call.1} parent=1 // pred_check_branch
      %21 = sbr.rel (0) target = $region9
    $region8: #{tpu_custom_call.1} parent=1 // pred_region
      %22 = dma.done [#allocation3], 512
    $region9: #{tpu_custom_call.1} parent=1 // pred_fallthru
      _
    %v23 = vld [vmem:[#allocation2] sm:$0xff]
    %v24 = vld [vmem:[#allocation2 + $0x8] sm:$0xff]
    %v25 = vld [vmem:[#allocation2 + $0x10] sm:$0xff]
    %v26 = vld [vmem:[#allocation2 + $0x18] sm:$0xff]
    %27 = vst [vmem:[#allocation5] sm:$0xff] %v23
    %28 = vst [vmem:[#allocation5 + $0x8] sm:$0xff] %v24
    %29 = vst [vmem:[#allocation5 + $0x14] sm:$0xff] %v25
    %30 = vst [vmem:[#allocation5 + $0x1c] sm:$0xff] %v26
    %v35 = vcombine.high %v23, %v23
    %v37 = vunpack.c.l.s4 1983009808
    %v38 = vunpack.c.0.s8 %v37
    %v39 = vlaneseq
    %v40 = vshrl.u32 %v39, 7
    %v41 = vsub.s32 %v38, %v40
    %v42 = vrot.slane %v23, %v41
    %v44 = vunpack.c.l.s4 1983009808
    %v45 = vunpack.c.0.s8 %v44
    %v46 = vlaneseq
    %v47 = vshrl.u32 %v46, 7
    %v48 = vsub.s32 %v45, %v47
    %v49 = vrot.slane %v35, %v48
    %v50 = vcombine.high %v42, %v42
    %v51 = vcombine.high %v49, %v49
    %v52 = vcombine.high %v24, %v24
    %v54 = vunpack.c.l.s4 1983009808
    %v55 = vunpack.c.0.s8 %v54
    %v56 = vlaneseq
    %v57 = vshrl.u32 %v56, 7
    %v58 = vsub.s32 %v55, %v57
    %v59 = vrot.slane %v24, %v58
    %v61 = vunpack.c.l.s4 1983009808
    %v62 = vunpack.c.0.s8 %v61
    %v63 = vlaneseq
    %v64 = vshrl.u32 %v63, 7
    %v65 = vsub.s32 %v62, %v64
    %v66 = vrot.slane %v52, %v65
    %v67 = vcombine.high %v59, %v59
    %v68 = vcombine.high %v66, %v66
    %v69 = vcombine.high %v25, %v25
    %v71 = vunpack.c.l.s4 1983009808
    %v72 = vunpack.c.0.s8 %v71
    %v73 = vlaneseq
    %v74 = vshrl.u32 %v73, 7
    %v75 = vsub.s32 %v72, %v74
    %v76 = vrot.slane %v25, %v75
    %v78 = vunpack.c.l.s4 1983009808
    %v79 = vunpack.c.0.s8 %v78
    %v80 = vlaneseq
    %v81 = vshrl.u32 %v80, 7
    %v82 = vsub.s32 %v79, %v81
    %v83 = vrot.slane %v69, %v82
    %v84 = vcombine.high %v76, %v76
    %v85 = vcombine.high %v83, %v83
    %v86 = vcombine.high %v26, %v26
    %v88 = vunpack.c.l.s4 1983009808
    %v89 = vunpack.c.0.s8 %v88
    %v90 = vlaneseq
    %v91 = vshrl.u32 %v90, 7
    %v92 = vsub.s32 %v89, %v91
    %v93 = vrot.slane %v26, %v92
    %v95 = vunpack.c.l.s4 1983009808
    %v96 = vunpack.c.0.s8 %v95
    %v97 = vlaneseq
    %v98 = vshrl.u32 %v97, 7
    %v99 = vsub.s32 %v96, %v98
    %v100 = vrot.slane %v86, %v99
    %v101 = vcombine.high %v93, %v93
    %v102 = vcombine.high %v100, %v100
    %vm119 = vcmask 1041408
    %v120 = vsel %vm119, %v42, 0.0
    %v121 = vsel %vm119, %v76, 0.0
    %v122 = vadd.f32 %v120, %v121
    %v123 = vsel %vm119, %v50, 0.0
    %v124 = vsel %vm119, %v84, 0.0
    %v125 = vadd.f32 %v123, %v124
    %v126 = vsel %vm119, %v49, 0.0
    %v127 = vsel %vm119, %v83, 0.0
    %v128 = vadd.f32 %v126, %v127
    %v129 = vsel %vm119, %v51, 0.0
    %v130 = vsel %vm119, %v85, 0.0
    %v131 = vadd.f32 %v129, %v130
    %v132 = vsel %vm119, %v59, 0.0
    %v133 = vsel %vm119, %v93, 0.0
    %v134 = vadd.f32 %v132, %v133
    %v135 = vsel %vm119, %v67, 0.0
    %v136 = vsel %vm119, %v101, 0.0
    %v137 = vadd.f32 %v135, %v136
    %v138 = vsel %vm119, %v66, 0.0
    %v139 = vsel %vm119, %v100, 0.0
    %v140 = vadd.f32 %v138, %v139
    %v141 = vsel %vm119, %v68, 0.0
    %v142 = vsel %vm119, %v102, 0.0
    %v143 = vadd.f32 %v141, %v142
    %v144 = vrcp.pop 2.0
    %v145 = vmul.f32 %v122, %v144
    %v146 = vmul.f32 %v125, %v144
    %v147 = vmul.f32 %v128, %v144
    %v148 = vmul.f32 %v131, %v144
    %v149 = vmul.f32 %v134, %v144
    %v150 = vmul.f32 %v137, %v144
    %v151 = vmul.f32 %v140, %v144
    %v152 = vmul.f32 %v143, %v144
    %v161 = vcombine.low %v145, %v146
    %v162 = vcombine.low %v147, %v148
    %v164 = vunpack.c.l.s4 1983009808
    %v165 = vunpack.c.0.s8 %v164
    %v166 = vlaneseq
    %v167 = vshrl.u32 %v166, 7
    %v168 = vsub.s32 %v165, %v167
    %v169 = vrot.slane %v161, %v168
    %v171 = vunpack.c.l.s4 1983009808
    %v172 = vunpack.c.0.s8 %v171
    %v173 = vlaneseq
    %v174 = vshrl.u32 %v173, 7
    %v175 = vsub.s32 %v172, %v174
    %v176 = vrot.slane %v162, %v175
    %v177 = vcombine.low %v169, %v176
    %v178 = vcombine.low %v149, %v150
    %v179 = vcombine.low %v151, %v152
    %v181 = vunpack.c.l.s4 1983009808
    %v182 = vunpack.c.0.s8 %v181
    %v183 = vlaneseq
    %v184 = vshrl.u32 %v183, 7
    %v185 = vsub.s32 %v182, %v184
    %v186 = vrot.slane %v178, %v185
    %v188 = vunpack.c.l.s4 1983009808
    %v189 = vunpack.c.0.s8 %v188
    %v190 = vlaneseq
    %v191 = vshrl.u32 %v190, 7
    %v192 = vsub.s32 %v189, %v191
    %v193 = vrot.slane %v179, %v192
    %v194 = vcombine.low %v186, %v193
    %v197 = vsub.f32 %v23, %v177
    %v198 = vsub.f32 %v24, %v194
    %v199 = vsub.f32 %v25, %v177
    %v200 = vsub.f32 %v26, %v194
    %v201 = vmul.f32 %v197, %v197
    %v202 = vmul.f32 %v198, %v198
    %v203 = vmul.f32 %v199, %v199
    %v204 = vmul.f32 %v200, %v200
    %v209 = vcombine.high %v201, %v201
    %v211 = vunpack.c.l.s4 1983009808
    %v212 = vunpack.c.0.s8 %v211
    %v213 = vlaneseq
    %v214 = vshrl.u32 %v213, 7
    %v215 = vsub.s32 %v212, %v214
    %v216 = vrot.slane %v201, %v215
    %v218 = vunpack.c.l.s4 1983009808
    %v219 = vunpack.c.0.s8 %v218
    %v220 = vlaneseq
    %v221 = vshrl.u32 %v220, 7
    %v222 = vsub.s32 %v219, %v221
    %v223 = vrot.slane %v209, %v222
    %v224 = vcombine.high %v216, %v216
    %v225 = vcombine.high %v223, %v223
    %v226 = vcombine.high %v202, %v202
    %v228 = vunpack.c.l.s4 1983009808
    %v229 = vunpack.c.0.s8 %v228
    %v230 = vlaneseq
    %v231 = vshrl.u32 %v230, 7
    %v232 = vsub.s32 %v229, %v231
    %v233 = vrot.slane %v202, %v232
    %v235 = vunpack.c.l.s4 1983009808
    %v236 = vunpack.c.0.s8 %v235
    %v237 = vlaneseq
    %v238 = vshrl.u32 %v237, 7
    %v239 = vsub.s32 %v236, %v238
    %v240 = vrot.slane %v226, %v239
    %v241 = vcombine.high %v233, %v233
    %v242 = vcombine.high %v240, %v240
    %v243 = vcombine.high %v203, %v203
    %v245 = vunpack.c.l.s4 1983009808
    %v246 = vunpack.c.0.s8 %v245
    %v247 = vlaneseq
    %v248 = vshrl.u32 %v247, 7
    %v249 = vsub.s32 %v246, %v248
    %v250 = vrot.slane %v203, %v249
    %v252 = vunpack.c.l.s4 1983009808
    %v253 = vunpack.c.0.s8 %v252
    %v254 = vlaneseq
    %v255 = vshrl.u32 %v254, 7
    %v256 = vsub.s32 %v253, %v255
    %v257 = vrot.slane %v243, %v256
    %v258 = vcombine.high %v250, %v250
    %v259 = vcombine.high %v257, %v257
    %v260 = vcombine.high %v204, %v204
    %v262 = vunpack.c.l.s4 1983009808
    %v263 = vunpack.c.0.s8 %v262
    %v264 = vlaneseq
    %v265 = vshrl.u32 %v264, 7
    %v266 = vsub.s32 %v263, %v265
    %v267 = vrot.slane %v204, %v266
    %v269 = vunpack.c.l.s4 1983009808
    %v270 = vunpack.c.0.s8 %v269
    %v271 = vlaneseq
    %v272 = vshrl.u32 %v271, 7
    %v273 = vsub.s32 %v270, %v272
    %v274 = vrot.slane %v260, %v273
    %v275 = vcombine.high %v267, %v267
    %v276 = vcombine.high %v274, %v274
    %v293 = vsel %vm119, %v216, 0.0
    %v294 = vsel %vm119, %v250, 0.0
    %v295 = vadd.f32 %v293, %v294
    %v296 = vsel %vm119, %v224, 0.0
    %v297 = vsel %vm119, %v258, 0.0
    %v298 = vadd.f32 %v296, %v297
    %v299 = vsel %vm119, %v223, 0.0
    %v300 = vsel %vm119, %v257, 0.0
    %v301 = vadd.f32 %v299, %v300
    %v302 = vsel %vm119, %v225, 0.0
    %v303 = vsel %vm119, %v259, 0.0
    %v304 = vadd.f32 %v302, %v303
    %v305 = vsel %vm119, %v233, 0.0
    %v306 = vsel %vm119, %v267, 0.0
    %v307 = vadd.f32 %v305, %v306
    %v308 = vsel %vm119, %v241, 0.0
    %v309 = vsel %vm119, %v275, 0.0
    %v310 = vadd.f32 %v308, %v309
    %v311 = vsel %vm119, %v240, 0.0
    %v312 = vsel %vm119, %v274, 0.0
    %v313 = vadd.f32 %v311, %v312
    %v314 = vsel %vm119, %v242, 0.0
    %v315 = vsel %vm119, %v276, 0.0
    %v316 = vadd.f32 %v314, %v315
    %v317 = vmul.f32 %v295, %v144
    %v318 = vmul.f32 %v298, %v144
    %v319 = vmul.f32 %v301, %v144
    %v320 = vmul.f32 %v304, %v144
    %v321 = vmul.f32 %v307, %v144
    %v322 = vmul.f32 %v310, %v144
    %v323 = vmul.f32 %v313, %v144
    %v324 = vmul.f32 %v316, %v144
    %v325 = vadd.f32 %v317, 1e-08
    %v326 = vadd.f32 %v318, 1e-08
    %v327 = vadd.f32 %v319, 1e-08
    %v328 = vadd.f32 %v320, 1e-08
    %v329 = vadd.f32 %v321, 1e-08
    %v330 = vadd.f32 %v322, 1e-08
    %v331 = vadd.f32 %v323, 1e-08
    %v332 = vadd.f32 %v324, 1e-08
    %v333 = vrsqrt.pop %v325
    %v334 = vmul.f32 %v325, %v333
    %vm335 = vcmp.eq.f32.partialorder %v325, inf
    %v336 = vsel %vm335, %v325, %v334
    %vm337 = vcmp.eq.f32.partialorder %v325, 0.0
    %v338 = vand.u32 %v325, 2147483648
    %v339 = vsel %vm337, %v338, %v336
    %v340 = vrsqrt.pop %v326
    %v341 = vmul.f32 %v326, %v340
    %vm342 = vcmp.eq.f32.partialorder %v326, inf
    %v343 = vsel %vm342, %v326, %v341
    %vm344 = vcmp.eq.f32.partialorder %v326, 0.0
    %v345 = vand.u32 %v326, 2147483648
    %v346 = vsel %vm344, %v345, %v343
    %v347 = vrsqrt.pop %v327
    %v348 = vmul.f32 %v327, %v347
    %vm349 = vcmp.eq.f32.partialorder %v327, inf
    %v350 = vsel %vm349, %v327, %v348
    %vm351 = vcmp.eq.f32.partialorder %v327, 0.0
    %v352 = vand.u32 %v327, 2147483648
    %v353 = vsel %vm351, %v352, %v350
    %v354 = vrsqrt.pop %v328
    %v355 = vmul.f32 %v328, %v354
    %vm356 = vcmp.eq.f32.partialorder %v328, inf
    %v357 = vsel %vm356, %v328, %v355
    %vm358 = vcmp.eq.f32.partialorder %v328, 0.0
    %v359 = vand.u32 %v328, 2147483648
    %v360 = vsel %vm358, %v359, %v357
    %v361 = vrsqrt.pop %v329
    %v362 = vmul.f32 %v329, %v361
    %vm363 = vcmp.eq.f32.partialorder %v329, inf
    %v364 = vsel %vm363, %v329, %v362
    %vm365 = vcmp.eq.f32.partialorder %v329, 0.0
    %v366 = vand.u32 %v329, 2147483648
    %v367 = vsel %vm365, %v366, %v364
    %v368 = vrsqrt.pop %v330
    %v369 = vmul.f32 %v330, %v368
    %vm370 = vcmp.eq.f32.partialorder %v330, inf
    %v371 = vsel %vm370, %v330, %v369
    %vm372 = vcmp.eq.f32.partialorder %v330, 0.0
    %v373 = vand.u32 %v330, 2147483648
    %v374 = vsel %vm372, %v373, %v371
    %v375 = vrsqrt.pop %v331
    %v376 = vmul.f32 %v331, %v375
    %vm377 = vcmp.eq.f32.partialorder %v331, inf
    %v378 = vsel %vm377, %v331, %v376
    %vm379 = vcmp.eq.f32.partialorder %v331, 0.0
    %v380 = vand.u32 %v331, 2147483648
    %v381 = vsel %vm379, %v380, %v378
    %v382 = vrsqrt.pop %v332
    %v383 = vmul.f32 %v332, %v382
    %vm384 = vcmp.eq.f32.partialorder %v332, inf
    %v385 = vsel %vm384, %v332, %v383
    %vm386 = vcmp.eq.f32.partialorder %v332, 0.0
    %v387 = vand.u32 %v332, 2147483648
    %v388 = vsel %vm386, %v387, %v385
    %v389 = vsel %vm119, %v339, 0.0
    %v390 = vsel %vm119, %v346, 0.0
    %v391 = vadd.f32 %v389, %v390
    %v392 = vsel %vm119, %v353, 0.0
    %v393 = vadd.f32 %v391, %v392
    %v394 = vsel %vm119, %v360, 0.0
    %v395 = vadd.f32 %v393, %v394
    %v396 = vsel %vm119, %v367, 0.0
    %v397 = vadd.f32 %v395, %v396
    %v398 = vsel %vm119, %v374, 0.0
    %v399 = vadd.f32 %v397, %v398
    %v400 = vsel %vm119, %v381, 0.0
    %v401 = vadd.f32 %v399, %v400
    %v402 = vsel %vm119, %v388, 0.0
    %v403 = vadd.f32 %v401, %v402
    %404 = vadd.xlane.f32.xlu0 %v403
    %v405 = vpop.xlane.xlu0 %404
    %v406 = vrcp.pop 1024.0
    %v407 = vmul.f32 %v405, %v406
    %v410 = vunpack.c.l.s4 269488144
    %v411 = vunpack.c.0.s8 %v410
    %v412 = vlaneseq
    %v413 = vshrl.u32 %v412, 7
    %v414 = vsub.s32 %v411, %v413
    %v415 = vrot.slane %v407, %v414
    %417 = vst [vmem:[#allocation5 + $0x10] sm:$0xf] %v415
    %418 = vst [vmem:[#allocation5 + $0x24] sm:$0xf] %v415
    // Predicated region
    $region10: #{tpu_custom_call.1} parent=1 // pred_check
      _
    $region11: #{tpu_custom_call.1} parent=1 // pred_check_branch
      %420 = sbr.rel (0) target = $region13
    $region12: #{tpu_custom_call.1} parent=1 // pred_region
      %s422 = ssub.s32 640, 640
      %423 = vsyncadd [#allocation4], %s422
      %s424 = sshll.u32 [#allocation5], 4
      %s425 = int_to_ptr.vmem [resolvable:$true] %s424
      %430 = dma.vmem_to_hbm [thread:$0]  %s425, 640, %s1, [#allocation4], 320, 320, 20
    $region13: #{tpu_custom_call.1} parent=1 // pred_fallthru
      _
    // Predicated region
    $region14: #{tpu_custom_call.1} parent=1 // pred_check
      _
    $region15: #{tpu_custom_call.1} parent=1 // pred_check_branch
      %432 = sbr.rel (0) target = $region17
    $region16: #{tpu_custom_call.1} parent=1 // pred_region
      %433 = dma.done [#allocation4], 640
    $region17: #{tpu_custom_call.1} parent=1 // pred_fallthru
      _
    %434 = vsyncpa [#allocation3], 1
    %435 = vsyncpa [#allocation4], 1

</llo_original>
